<compile_context>
chip_gen: v6e
topology: v6e:2x2x1
jax: 0.10.0
libtpu: 0.0.40
codegen_flags: <defaults>
</compile_context>

<pallas_src>
import functools

import jax
import jax.numpy as jnp
from jax.experimental import pallas as pl
from jax.experimental.pallas import tpu as pltpu

ALPHA = 0.5
GAMMA = 3


def _round_up(x, m):
    return (x + m - 1) // m * m


def _focal_partial_kernel(c0_ref, c1_ref, logits_ref, targets_ref, partial_ref,
                          *, gamma, tile_b, chunk, n_chunks, batch, mask_rows):
    C = logits_ref.shape[-1]
    g = chunk // 8
    c0 = c0_ref[...][None]                      # (1, 8, C)  w*(1-alpha)
    c1 = c1_ref[...][None]                      # (1, 8, C)  w*(2*alpha-1)
    base = pl.program_id(0) * tile_b            # global row of this tile

    def chunk_body(j, acc):
        start = j * chunk
        if not isinstance(start, int):
            start = pl.multiple_of(start, chunk)
        x = logits_ref[pl.ds(start, chunk), :].astype(jnp.float32).reshape(g, 8, C)
        t = targets_ref[pl.ds(start, chunk), :].astype(jnp.float32).reshape(g, 8, C)

        # Shared transcendental: e = exp(-|x|) feeds BOTH the stable BCE tail
        # and the branchless sigmoid.
        e = jnp.exp(-jnp.abs(x))
        # BCEWithLogitsLoss(reduction='none'): max(x,0) - x*t + log1p(exp(-|x|))
        bce = jnp.maximum(x, 0.0) - x * t + jnp.log1p(e)
        inv = pl.reciprocal(1.0 + e, approx=True)      # EUP slot, not VALU
        p = jnp.where(x >= 0.0, 1.0, e) * inv          # sigmoid(x), one exp total

        pg = p ** gamma                                # integer_pow -> VPU muls
        focal = pg + t * ((1.0 - p) ** gamma - pg)
        loss = (c0 + c1 * t) * focal * bce             # class_weights*alpha_w folded

        if mask_rows:
            # Zero contributions of padded rows (block may overhang the batch).
            row = (base + start
                   + jax.lax.broadcasted_iota(jnp.int32, (g, 8, 1), 0) * 8
                   + jax.lax.broadcasted_iota(jnp.int32, (g, 8, 1), 1))
            loss = jnp.where(row < batch, loss, 0.0)

        # Fold row-groups with plain VPU adds (no hot-loop XLU reduce).
        return acc + loss.sum(axis=0)

    zero = jnp.zeros((8, C), jnp.float32)
    if n_chunks == 1:
        acc = chunk_body(0, zero)
    else:
        acc = jax.lax.fori_loop(0, n_chunks, chunk_body, zero)
    partial_ref[...] = acc[None, :, :]                 # (1, 8, C) lane-dense store


def _plan_tiling(B, C, itemsize, tile_b=None):
    """Generation-aware tile/chunk selection."""
    try:
        phys = int(pltpu.get_tpu_info().vmem_capacity_bytes)
    except Exception:
        phys = 64 * 1024 * 1024                        # conservative fallback
    # Scoped-VMEM budget we request: half of physical, at most 64 MiB
    # (v7x: 32 MiB of its 64 MiB; v5e/v6e: 64 MiB of 128 MiB).
    vmem_limit = int(min(phys // 2, 64 * 1024 * 1024))

    align = 16 if itemsize < 4 else 8                  # bf16 sublane packing
    # Inner chunk: ~16K elements per intermediate -> a few vregs of pressure.
    chunk = max(align, ((16384 // max(C, 1)) // align) * align)

    if tile_b is None:
        # 2 inputs x 2 pipeline buffers must fit in half the scoped limit;
        # target ~4 MiB per input per step (>= ~8 MiB streamed / grid step).
        per_buf_cap = (vmem_limit // 2) // 4
        target = min(per_buf_cap, 4 * 1024 * 1024)
        tile_b = max(chunk, (target // (C * itemsize)) // chunk * chunk)
    else:
        tile_b = _round_up(int(tile_b), align)
        chunk = min(chunk, tile_b)
        tile_b = _round_up(tile_b, chunk)

    b_pad = _round_up(B, align)
    if tile_b >= b_pad:                                # one tile covers the batch
        chunk = min(chunk, b_pad)
        tile_b = _round_up(b_pad, chunk)

    # Keep >= 2 grid steps for big inputs so both v7x TensorCores get work.
    if (pl.cdiv(B, tile_b) == 1 and tile_b >= 2 * chunk
            and B * C * itemsize >= (1 << 20)):
        tile_b = _round_up(tile_b // 2, chunk)

    num_tiles = int(pl.cdiv(B, tile_b))
    n_chunks = tile_b // chunk
    mask_rows = (num_tiles * tile_b != B)
    return tile_b, chunk, n_chunks, num_tiles, mask_rows, vmem_limit


def bce_focal_loss(logits, targets, class_weights, alpha=ALPHA, gamma=GAMMA,
                   tile_b=None):
    B, C = logits.shape
    assert targets.shape == (B, C)

    # Keep gamma a Python int when possible so p**gamma lowers to integer_pow
    # (plain VPU multiplies) instead of exp/log pow — also catches np scalars.
    try:
        gf = float(gamma)
        if gf.is_integer():
            gamma = int(gf)
    except (TypeError, ValueError):
        pass
    alpha = float(alpha)

    itemsize = max(jnp.dtype(logits.dtype).itemsize,
                   jnp.dtype(targets.dtype).itemsize)
    tile_b, chunk, n_chunks, num_tiles, mask_rows, vmem_limit = _plan_tiling(
        B, C, itemsize, tile_b)

    # Fold class_weights and alpha into two per-class constants, pre-broadcast
    # to a full (8, C) vreg row-group so the in-kernel FMA needs no sublane
    # broadcast:  class_weights * alpha_weight == c0 + c1 * t.
    w = jnp.asarray(class_weights, jnp.float32).reshape(1, C)
    c0 = jnp.broadcast_to(w * (1.0 - alpha), (8, C))
    c1 = jnp.broadcast_to(w * (2.0 * alpha - 1.0), (8, C))

    kernel = functools.partial(
        _focal_partial_kernel, gamma=gamma, tile_b=tile_b, chunk=chunk,
        n_chunks=n_chunks, batch=B, mask_rows=mask_rows)

    # TODO(synk): if C is tiny (<<128), lane utilization is low; a lane-dense
    # (N/128, 128) repacking of the inputs would help but needs an extra pass.
    partials = pl.pallas_call(
        kernel,
        out_shape=jax.ShapeDtypeStruct((num_tiles, 8, C), jnp.float32),
        grid_spec=pltpu.PrefetchScalarGridSpec(
            num_scalar_prefetch=0,
            grid=(num_tiles,),
            in_specs=[
                pl.BlockSpec((8, C), lambda i: (0, 0)),        # c0
                pl.BlockSpec((8, C), lambda i: (0, 0)),        # c1
                pl.BlockSpec((tile_b, C), lambda i: (i, 0)),   # logits
                pl.BlockSpec((tile_b, C), lambda i: (i, 0)),   # targets
            ],
            out_specs=pl.BlockSpec((1, 8, C), lambda i: (i, 0, 0)),
        ),
        # No carried accumulator -> grid axis is truly parallel (uses both
        # TensorCores on v7x; harmless on single-TC v5e/v6e).
        compiler_params=pltpu.CompilerParams(
            dimension_semantics=("parallel",),
            vmem_limit_bytes=vmem_limit),
    )(c0, c1, logits, targets)

    # Tiny final reduction (num_tiles * 8 * C elements) + mean in the wrapper.
    return jnp.sum(partials) / jnp.float32(B * C)


def _reference(logits, targets, class_weights, alpha=ALPHA, gamma=GAMMA):
    x = logits.astype(jnp.float32)
    t = targets.astype(jnp.float32)
    bce = jnp.maximum(x, 0.0) - x * t + jnp.log1p(jnp.exp(-jnp.abs(x)))
    p = jax.nn.sigmoid(x)
    focal = t * (1 - p) ** gamma + (1 - t) * p ** gamma
    aw = t * alpha + (1 - t) * (1 - alpha)
    w = jnp.asarray(class_weights, jnp.float32).reshape(1, -1)
    return jnp.mean(w * focal * aw * bce)


if __name__ == "__main__":
    key = jax.random.PRNGKey(0)
    k1, k2, k3, k4 = jax.random.split(key, 4)

    # Small multi-label classification shapes (single-tile path).
    B, C = 32, 128
    logits = jax.random.normal(k1, (B, C), dtype=jnp.float32) * 2.0
    targets = (jax.random.uniform(k2, (B, C)) > 0.5).astype(jnp.float32)
    class_weights = 0.5 + jnp.arange(C, dtype=jnp.float32) / C

    loss = bce_focal_loss(logits, targets, class_weights)
    jax.block_until_ready(loss)
    ref = _reference(logits, targets, class_weights)
    # approx (EUP) reciprocal in the kernel -> compare at ~1e-3 level.
    assert jnp.allclose(loss, ref, rtol=5e-3, atol=1e-6), (loss, ref)

    # Ragged batch (B not aligned to the tile) -> in-kernel masked-tail path.
    B2 = 200
    logits2 = jax.random.normal(k3, (B2, C), dtype=jnp.float32) * 2.0
    targets2 = (jax.random.uniform(k4, (B2, C)) > 0.5).astype(jnp.float32)
    loss2 = bce_focal_loss(logits2, targets2, class_weights)
    jax.block_until_ready(loss2)
    ref2 = _reference(logits2, targets2, class_weights)
    assert jnp.allclose(loss2, ref2, rtol=5e-3, atol=1e-6), (loss2, ref2)

    # Small / non-128 class count sanity check (full-extent lane block).
    B3, C3 = 16, 6
    logits3 = jax.random.normal(k1, (B3, C3), dtype=jnp.float32)
    targets3 = (jax.random.uniform(k2, (B3, C3)) > 0.5).astype(jnp.float32)
    cw3 = jnp.ones((C3,), jnp.float32)
    loss3 = bce_focal_loss(logits3, targets3, cw3)
    jax.block_until_ready(loss3)
    ref3 = _reference(logits3, targets3, cw3)
    assert jnp.allclose(loss3, ref3, rtol=5e-3, atol=1e-6), (loss3, ref3)

    print("KERNEL_OK")
</pallas_src>

<mosaic_0001>
module attributes {stable_mosaic.version = 11 : i64} {
  func.func @_focal_partial_kernel(%arg0: i32, %arg1: memref<8x128xf32, #tpu.memory_space<vmem>>, %arg2: memref<8x128xf32, #tpu.memory_space<vmem>>, %arg3: memref<32x128xf32, #tpu.memory_space<vmem>>, %arg4: memref<32x128xf32, #tpu.memory_space<vmem>>, %arg5: memref<1x8x128xf32, #tpu.memory_space<vmem>>) attributes {dimension_semantics = [#tpu.dimension_semantics<parallel>], iteration_bounds = array<i64: 1>, scalar_prefetch = 0 : i64, scratch_operands = 0 : i64, tpu.core_type = #tpu.core_type<tc>, window_params = [{pipeline_mode = #tpu.pipeline_mode<synchronous>, transform_indices = @transform_0, window_bounds = array<i64: 8, 128>}, {pipeline_mode = #tpu.pipeline_mode<synchronous>, transform_indices = @transform_1, window_bounds = array<i64: 8, 128>}, {transform_indices = @transform_2, window_bounds = array<i64: 32, 128>}, {transform_indices = @transform_3, window_bounds = array<i64: 32, 128>}, {transform_indices = @transform_4, window_bounds = array<i64: 1, 8, 128>}]} {
    %c0 = arith.constant 0 : index
    %c0_0 = arith.constant 0 : index
    %0 = vector.load %arg1[%c0, %c0_0] : memref<8x128xf32, #tpu.memory_space<vmem>>, vector<8x128xf32>
    %1 = vector.shape_cast %0 : vector<8x128xf32> to vector<1x8x128xf32>
    %c0_1 = arith.constant 0 : index
    %c0_2 = arith.constant 0 : index
    %2 = vector.load %arg2[%c0_1, %c0_2] : memref<8x128xf32, #tpu.memory_space<vmem>>, vector<8x128xf32>
    %3 = vector.shape_cast %2 : vector<8x128xf32> to vector<1x8x128xf32>
    %cst = arith.constant 0.000000e+00 : f32
    %4 = vector.broadcast %cst : f32 to vector<8x128xf32>
    %c0_3 = arith.constant 0 : index
    %c0_4 = arith.constant 0 : index
    %5 = vector.load %arg3[%c0_3, %c0_4] : memref<32x128xf32, #tpu.memory_space<vmem>>, vector<32x128xf32>
    %6 = vector.shape_cast %5 : vector<32x128xf32> to vector<4x8x128xf32>
    %c0_5 = arith.constant 0 : index
    %c0_6 = arith.constant 0 : index
    %7 = vector.load %arg4[%c0_5, %c0_6] : memref<32x128xf32, #tpu.memory_space<vmem>>, vector<32x128xf32>
    %8 = vector.shape_cast %7 : vector<32x128xf32> to vector<4x8x128xf32>
    %9 = math.absf %6 : vector<4x8x128xf32>
    %cst_7 = arith.constant 0.000000e+00 : f32
    %10 = vector.broadcast %cst_7 : f32 to vector<4x8x128xf32>
    %11 = arith.subf %10, %9 : vector<4x8x128xf32>
    %12 = math.exp %11 : vector<4x8x128xf32>
    %cst_8 = arith.constant 0.000000e+00 : f32
    %13 = vector.broadcast %cst_8 : f32 to vector<4x8x128xf32>
    %14 = arith.maximumf %6, %13 : vector<4x8x128xf32>
    %15 = arith.mulf %6, %8 : vector<4x8x128xf32>
    %16 = arith.subf %14, %15 : vector<4x8x128xf32>
    %17 = math.log1p %12 : vector<4x8x128xf32>
    %18 = arith.addf %16, %17 : vector<4x8x128xf32>
    %cst_9 = arith.constant 1.000000e+00 : f32
    %19 = vector.broadcast %cst_9 : f32 to vector<4x8x128xf32>
    %20 = arith.addf %19, %12 : vector<4x8x128xf32>
    %21 = tpu.reciprocal %20 {approx = true} : vector<4x8x128xf32> -> vector<4x8x128xf32>
    %cst_10 = arith.constant 0.000000e+00 : f32
    %22 = vector.broadcast %cst_10 : f32 to vector<4x8x128xf32>
    %23 = arith.cmpf oge, %6, %22 : vector<4x8x128xf32>
    %cst_11 = arith.constant 1.000000e+00 : f32
    %24 = vector.broadcast %cst_11 : f32 to vector<4x8x128xf32>
    %25 = arith.select %23, %24, %12 : vector<4x8x128xi1>, vector<4x8x128xf32>
    %26 = arith.mulf %25, %21 : vector<4x8x128xf32>
    %27 = arith.mulf %26, %26 : vector<4x8x128xf32>
    %28 = arith.mulf %26, %27 : vector<4x8x128xf32>
    %cst_12 = arith.constant 1.000000e+00 : f32
    %29 = vector.broadcast %cst_12 : f32 to vector<4x8x128xf32>
    %30 = arith.subf %29, %26 : vector<4x8x128xf32>
    %31 = arith.mulf %30, %30 : vector<4x8x128xf32>
    %32 = arith.mulf %30, %31 : vector<4x8x128xf32>
    %33 = arith.subf %32, %28 : vector<4x8x128xf32>
    %34 = arith.mulf %8, %33 : vector<4x8x128xf32>
    %35 = arith.addf %28, %34 : vector<4x8x128xf32>
    %36 = vector.broadcast %3 : vector<1x8x128xf32> to vector<4x8x128xf32>
    %37 = arith.mulf %36, %8 : vector<4x8x128xf32>
    %38 = vector.broadcast %1 : vector<1x8x128xf32> to vector<4x8x128xf32>
    %39 = arith.addf %38, %37 : vector<4x8x128xf32>
    %40 = arith.mulf %39, %35 : vector<4x8x128xf32>
    %41 = arith.mulf %40, %18 : vector<4x8x128xf32>
    %cst_13 = arith.constant dense<0.000000e+00> : vector<8x128xf32>
    %42 = vector.multi_reduction <add>, %41, %cst_13 [0] : vector<4x8x128xf32> to vector<8x128xf32>
    %43 = arith.addf %4, %42 : vector<8x128xf32>
    %44 = vector.shape_cast %43 : vector<8x128xf32> to vector<1x8x128xf32>
    %c0_14 = arith.constant 0 : index
    %c0_15 = arith.constant 0 : index
    %c0_16 = arith.constant 0 : index
    %45 = vector.load %arg5[%c0_14, %c0_15, %c0_16] : memref<1x8x128xf32, #tpu.memory_space<vmem>>, vector<1x8x128xf32>
    tpu.vector_store %arg5[%c0_14, %c0_15, %c0_16], %44 {strides = array<i32>} : memref<1x8x128xf32, #tpu.memory_space<vmem>>, vector<1x8x128xf32>,
    return
  }
  func.func @transform_0(%arg0: i32) -> (i32, i32) {
    %c0_i32 = arith.constant 0 : i32
    %c0_i32_0 = arith.constant 0 : i32
    %c0_i32_1 = arith.constant 0 : i32
    return %c0_i32, %c0_i32_0 : i32, i32
  }
  func.func @transform_1(%arg0: i32) -> (i32, i32) {
    %c0_i32 = arith.constant 0 : i32
    %c0_i32_0 = arith.constant 0 : i32
    %c0_i32_1 = arith.constant 0 : i32
    return %c0_i32, %c0_i32_0 : i32, i32
  }
  func.func @transform_2(%arg0: i32) -> (i32, i32) {
    %c0_i32 = arith.constant 0 : i32
    %c0_i32_0 = arith.constant 0 : i32
    return %arg0, %c0_i32 : i32, i32
  }
  func.func @transform_3(%arg0: i32) -> (i32, i32) {
    %c0_i32 = arith.constant 0 : i32
    %c0_i32_0 = arith.constant 0 : i32
    return %arg0, %c0_i32 : i32, i32
  }
  func.func @transform_4(%arg0: i32) -> (i32, i32, i32) {
    %c0_i32 = arith.constant 0 : i32
    %c0_i32_0 = arith.constant 0 : i32
    %c0_i32_1 = arith.constant 0 : i32
    return %arg0, %c0_i32, %c0_i32_0 : i32, i32, i32
  }
}

</mosaic_0001>

<llo_original>
// kernel: tpu_custom_call.1
$region0: #{tpu_custom_call.1}
  #allocation0 [shape = 'u32[]', space=smem, size = 0x4, offset = 0x4, fixed_abs, tag = 'smem constant byte address 0x4 - core index']
  #allocation1 [shape = 'u32[144,128]{1,0:T(1,128)}', space=vmem, size = 0x12000, scoped, tag = 'internal scratch']
  %s0 = inlined_call_operand.hbm [shape: f32[8,128], index: 0, kind: input, shape index: {}]
  %s1 = inlined_call_operand.hbm [shape: f32[8,128], index: 1, kind: input, shape index: {}]
  %s2 = inlined_call_operand.hbm [shape: f32[32,128], index: 2, kind: input, shape index: {}]
  %s3 = inlined_call_operand.hbm [shape: f32[32,128], index: 3, kind: input, shape index: {}]
  %s4 = inlined_call_operand.hbm [shape: f32[1,8,128], index: 4, kind: output, shape index: {}]
  %s5 = sld [smem:[#allocation0]]
  $region42: #{tpu_custom_call.1} parent=0
    _
  %s7 = ssub.s32 1, %s5
  %s8 = scalar_select 0, %s7, %s5
  $region1: #{tpu_custom_call.1} parent=0
    #allocation2 [shape = 'u8[4096]{0}', space=vmem, size = 0x1000, scoped, tag = 'input window, operand 0, single buffered']
    #allocation3 [shape = 's32[1]{0}', space=sflag, size = 0x4, scoped, tag = 'scoped memory for tpu_custom_call.1']
    #allocation4 [shape = 's32[1]{0}', space=sflag, size = 0x4, scoped, tag = 'scoped memory for tpu_custom_call.1']
    #allocation5 [shape = 'u8[4096]{0}', space=vmem, size = 0x1000, scoped, tag = 'input window, operand 1, single buffered']
    #allocation6 [shape = 's32[1]{0}', space=sflag, size = 0x4, scoped, tag = 'scoped memory for tpu_custom_call.1']
    #allocation7 [shape = 'u8[16384]{0}', space=vmem, size = 0x4000, scoped, tag = 'input window, operand 2, single buffered']
    #allocation8 [shape = 'u8[16384]{0}', space=vmem, size = 0x4000, scoped, tag = 'input window, operand 3, single buffered']
    #allocation9 [shape = 's32[1]{0}', space=sflag, size = 0x4, scoped, tag = 'scoped memory for tpu_custom_call.1']
    #allocation10 [shape = 'u8[4096]{0}', space=vmem, size = 0x1000, scoped, tag = 'output window, operand 0, single buffered']
    %9 = vsyncpa [#allocation3], 0
    %10 = vsyncpa [#allocation6], 0
    %11 = vsyncpa [#allocation9], 0
    %12 = vsyncpa [#allocation4], 0
    // Predicated region
    $region2: #{tpu_custom_call.1} parent=1 // pred_check
      _
    $region3: #{tpu_custom_call.1} parent=1 // pred_check_branch
      %14 = sbr.rel (0) target = $region5
    $region4: #{tpu_custom_call.1} parent=1 // pred_region
      %s16 = ssub.s32 128, 128
      %17 = vsyncadd [#allocation3], %s16
      %s19 = sshll.u32 [#allocation2], 4
      %s20 = int_to_ptr.vmem [resolvable:$true] %s19
      %22 = dma.hbm_to_vmem [thread:$0]  %s0, 128, %s20, [#allocation3]
    $region5: #{tpu_custom_call.1} parent=1 // pred_fallthru
      _
    // Predicated region
    $region6: #{tpu_custom_call.1} parent=1 // pred_check
      _
    $region7: #{tpu_custom_call.1} parent=1 // pred_check_branch
      %24 = sbr.rel (0) target = $region9
    $region8: #{tpu_custom_call.1} parent=1 // pred_region
      %s26 = ssub.s32 128, 128
      %27 = vsyncadd [#allocation6], %s26
      %s29 = sshll.u32 [#allocation5], 4
      %s30 = int_to_ptr.vmem [resolvable:$true] %s29
      %32 = dma.hbm_to_vmem [thread:$0]  %s1, 128, %s30, [#allocation6]
    $region9: #{tpu_custom_call.1} parent=1 // pred_fallthru
      _
    // Predicated region
    $region10: #{tpu_custom_call.1} parent=1 // pred_check
      _
    $region11: #{tpu_custom_call.1} parent=1 // pred_check_branch
      %34 = sbr.rel (0) target = $region13
    $region12: #{tpu_custom_call.1} parent=1 // pred_region
      %s36 = ssub.s32 512, 512
      %37 = vsyncadd [#allocation6], %s36
      %s38 = sshll.u32 [#allocation7], 4
      %s39 = int_to_ptr.vmem [resolvable:$true] %s38
      %44 = dma.hbm_to_vmem [thread:$0]  %s2, 512, %s39, [#allocation6], 128, 128, 8
    $region13: #{tpu_custom_call.1} parent=1 // pred_fallthru
      _
    // Predicated region
    $region14: #{tpu_custom_call.1} parent=1 // pred_check
      _
    $region15: #{tpu_custom_call.1} parent=1 // pred_check_branch
      %46 = sbr.rel (0) target = $region17
    $region16: #{tpu_custom_call.1} parent=1 // pred_region
      %s48 = ssub.s32 512, 512
      %49 = vsyncadd [#allocation9], %s48
      %s50 = sshll.u32 [#allocation8], 4
      %s51 = int_to_ptr.vmem [resolvable:$true] %s50
      %56 = dma.hbm_to_vmem [thread:$0]  %s3, 512, %s51, [#allocation9], 128, 128, 8
    $region17: #{tpu_custom_call.1} parent=1 // pred_fallthru
      _
    // Predicated region
    $region18: #{tpu_custom_call.1} parent=1 // pred_check
      _
    $region19: #{tpu_custom_call.1} parent=1 // pred_check_branch
      %58 = sbr.rel (0) target = $region21
    $region20: #{tpu_custom_call.1} parent=1 // pred_region
      %59 = dma.done [#allocation3], 128
    $region21: #{tpu_custom_call.1} parent=1 // pred_fallthru
      _
    // Predicated region
    $region22: #{tpu_custom_call.1} parent=1 // pred_check
      _
    $region23: #{tpu_custom_call.1} parent=1 // pred_check_branch
      %61 = sbr.rel (0) target = $region25
    $region24: #{tpu_custom_call.1} parent=1 // pred_region
      %62 = dma.done [#allocation6], 128
    $region25: #{tpu_custom_call.1} parent=1 // pred_fallthru
      _
    // Predicated region
    $region26: #{tpu_custom_call.1} parent=1 // pred_check
      _
    $region27: #{tpu_custom_call.1} parent=1 // pred_check_branch
      %64 = sbr.rel (0) target = $region29
    $region28: #{tpu_custom_call.1} parent=1 // pred_region
      %65 = dma.done [#allocation6], 512
    $region29: #{tpu_custom_call.1} parent=1 // pred_fallthru
      _
    // Predicated region
    $region30: #{tpu_custom_call.1} parent=1 // pred_check
      _
    $region31: #{tpu_custom_call.1} parent=1 // pred_check_branch
      %67 = sbr.rel (0) target = $region33
    $region32: #{tpu_custom_call.1} parent=1 // pred_region
      %68 = dma.done [#allocation9], 512
    $region33: #{tpu_custom_call.1} parent=1 // pred_fallthru
      _
    %v69 = vld [vmem:[#allocation2] sm:$0xff]
    %v70 = vld [vmem:[#allocation5] sm:$0xff]
    %v71 = vld [vmem:[#allocation7] sm:$0xff]
    %v72 = vld [vmem:[#allocation7 + $0x8] sm:$0xff]
    %v73 = vld [vmem:[#allocation7 + $0x10] sm:$0xff]
    %v74 = vld [vmem:[#allocation7 + $0x18] sm:$0xff]
    %v75 = vld [vmem:[#allocation8] sm:$0xff]
    %v76 = vld [vmem:[#allocation8 + $0x8] sm:$0xff]
    %v77 = vld [vmem:[#allocation8 + $0x10] sm:$0xff]
    %v78 = vld [vmem:[#allocation8 + $0x18] sm:$0xff]
    %v79 = vand.u32 2147483647, %v71
    %v80 = vand.u32 2147483647, %v72
    %v81 = vand.u32 2147483647, %v73
    %v82 = vand.u32 2147483647, %v74
    %v83 = vsub.f32 0.0, %v79
    %v84 = vsub.f32 0.0, %v80
    %v85 = vsub.f32 0.0, %v81
    %v86 = vsub.f32 0.0, %v82
    %v87 = vmul.f32 %v83, 1.442695
    %v88 = vpow.pop %v87
    %v89 = vmul.f32 %v84, 1.442695
    %v90 = vpow.pop %v89
    %v91 = vmul.f32 %v85, 1.442695
    %v92 = vpow.pop %v91
    %v93 = vmul.f32 %v86, 1.442695
    %v94 = vpow.pop %v93
    %v95 = vmax.f32 %v71, 0.0
    %v96 = vmax.f32 %v72, 0.0
    %v97 = vmax.f32 %v73, 0.0
    %v98 = vmax.f32 %v74, 0.0
    %v99 = vmul.f32 %v71, %v75
    %v100 = vmul.f32 %v72, %v76
    %v101 = vmul.f32 %v73, %v77
    %v102 = vmul.f32 %v74, %v78
    %v103 = vsub.f32 %v95, %v99
    %v104 = vsub.f32 %v96, %v100
    %v105 = vsub.f32 %v97, %v101
    %v106 = vsub.f32 %v98, %v102
    %v107 = vadd.f32 %v88, 1.0
    %v108 = vlog2.pop %v107
    %v109 = vmul.f32 %v108, 0.6931472
    %v110 = vmul.f32 -0.5, %v88
    %v111 = vadd.f32 %v110, 1.0
    %v112 = vmul.f32 %v111, %v88
    %v113 = vand.u32 2147483647, %v88
    %vm114 = vcmp.lt.f32.partialorder %v113, 0.0004427343
    %v115 = vsel %vm114, %v112, %v109
    %v116 = vadd.f32 %v90, 1.0
    %v117 = vlog2.pop %v116
    %v118 = vmul.f32 %v117, 0.6931472
    %v119 = vmul.f32 -0.5, %v90
    %v120 = vadd.f32 %v119, 1.0
    %v121 = vmul.f32 %v120, %v90
    %v122 = vand.u32 2147483647, %v90
    %vm123 = vcmp.lt.f32.partialorder %v122, 0.0004427343
    %v124 = vsel %vm123, %v121, %v118
    %v125 = vadd.f32 %v92, 1.0
    %v126 = vlog2.pop %v125
    %v127 = vmul.f32 %v126, 0.6931472
    %v128 = vmul.f32 -0.5, %v92
    %v129 = vadd.f32 %v128, 1.0
    %v130 = vmul.f32 %v129, %v92
    %v131 = vand.u32 2147483647, %v92
    %vm132 = vcmp.lt.f32.partialorder %v131, 0.0004427343
    %v133 = vsel %vm132, %v130, %v127
    %v134 = vadd.f32 %v94, 1.0
    %v135 = vlog2.pop %v134
    %v136 = vmul.f32 %v135, 0.6931472
    %v137 = vmul.f32 -0.5, %v94
    %v138 = vadd.f32 %v137, 1.0
    %v139 = vmul.f32 %v138, %v94
    %v140 = vand.u32 2147483647, %v94
    %vm141 = vcmp.lt.f32.partialorder %v140, 0.0004427343
    %v142 = vsel %vm141, %v139, %v136
    %v143 = vadd.f32 %v103, %v115
    %v144 = vadd.f32 %v104, %v124
    %v145 = vadd.f32 %v105, %v133
    %v146 = vadd.f32 %v106, %v142
    %v147 = vadd.f32 %v88, 1.0
    %v148 = vadd.f32 %v90, 1.0
    %v149 = vadd.f32 %v92, 1.0
    %v150 = vadd.f32 %v94, 1.0
    %v151 = vrcp.pop %v147
    %v152 = vrcp.pop %v148
    %v153 = vrcp.pop %v149
    %v154 = vrcp.pop %v150
    %vm155 = vcmp.ge.f32.partialorder %v71, 0.0
    %vm156 = vcmp.ge.f32.partialorder %v72, 0.0
    %vm157 = vcmp.ge.f32.partialorder %v73, 0.0
    %vm158 = vcmp.ge.f32.partialorder %v74, 0.0
    %v159 = vsel %vm155, 1.0, %v88
    %v160 = vsel %vm156, 1.0, %v90
    %v161 = vsel %vm157, 1.0, %v92
    %v162 = vsel %vm158, 1.0, %v94
    %v163 = vmul.f32 %v159, %v151
    %v164 = vmul.f32 %v160, %v152
    %v165 = vmul.f32 %v161, %v153
    %v166 = vmul.f32 %v162, %v154
    %v167 = vmul.f32 %v163, %v163
    %v168 = vmul.f32 %v164, %v164
    %v169 = vmul.f32 %v165, %v165
    %v170 = vmul.f32 %v166, %v166
    %v171 = vmul.f32 %v163, %v167
    %v172 = vmul.f32 %v164, %v168
    %v173 = vmul.f32 %v165, %v169
    %v174 = vmul.f32 %v166, %v170
    %v175 = vsub.f32 1.0, %v163
    %v176 = vsub.f32 1.0, %v164
    %v177 = vsub.f32 1.0, %v165
    %v178 = vsub.f32 1.0, %v166
    %v179 = vmul.f32 %v175, %v175
    %v180 = vmul.f32 %v176, %v176
    %v181 = vmul.f32 %v177, %v177
    %v182 = vmul.f32 %v178, %v178
    %v183 = vmul.f32 %v175, %v179
    %v184 = vmul.f32 %v176, %v180
    %v185 = vmul.f32 %v177, %v181
    %v186 = vmul.f32 %v178, %v182
    %v187 = vsub.f32 %v183, %v171
    %v188 = vsub.f32 %v184, %v172
    %v189 = vsub.f32 %v185, %v173
    %v190 = vsub.f32 %v186, %v174
    %v191 = vmul.f32 %v75, %v187
    %v192 = vmul.f32 %v76, %v188
    %v193 = vmul.f32 %v77, %v189
    %v194 = vmul.f32 %v78, %v190
    %v195 = vadd.f32 %v171, %v191
    %v196 = vadd.f32 %v172, %v192
    %v197 = vadd.f32 %v173, %v193
    %v198 = vadd.f32 %v174, %v194
    %v199 = vmul.f32 %v70, %v75
    %v200 = vmul.f32 %v70, %v76
    %v201 = vmul.f32 %v70, %v77
    %v202 = vmul.f32 %v70, %v78
    %v203 = vadd.f32 %v69, %v199
    %v204 = vadd.f32 %v69, %v200
    %v205 = vadd.f32 %v69, %v201
    %v206 = vadd.f32 %v69, %v202
    %v207 = vmul.f32 %v203, %v195
    %v208 = vmul.f32 %v204, %v196
    %v209 = vmul.f32 %v205, %v197
    %v210 = vmul.f32 %v206, %v198
    %v211 = vmul.f32 %v207, %v143
    %v212 = vmul.f32 %v208, %v144
    %v213 = vmul.f32 %v209, %v145
    %v214 = vmul.f32 %v210, %v146
    %v215 = vadd.f32 %v211, %v212
    %v216 = vadd.f32 %v215, %v213
    %v217 = vadd.f32 %v216, %v214
    %v218 = vadd.f32 %v217, 0.0
    %219 = vst [vmem:[#allocation10] sm:$0xff] %v218
    // Predicated region
    $region34: #{tpu_custom_call.1} parent=1 // pred_check
      _
    $region35: #{tpu_custom_call.1} parent=1 // pred_check_branch
      %221 = sbr.rel (0) target = $region37
    $region36: #{tpu_custom_call.1} parent=1 // pred_region
      %s223 = ssub.s32 128, 128
      %224 = vsyncadd [#allocation4], %s223
      %s226 = sshll.u32 [#allocation10], 4
      %s227 = int_to_ptr.vmem [resolvable:$true] %s226
      %229 = dma.vmem_to_hbm [thread:$0]  %s227, 128, %s4, [#allocation4]
    $region37: #{tpu_custom_call.1} parent=1 // pred_fallthru
      _
    // Predicated region
    $region38: #{tpu_custom_call.1} parent=1 // pred_check
      _
    $region39: #{tpu_custom_call.1} parent=1 // pred_check_branch
      %231 = sbr.rel (0) target = $region41
    $region40: #{tpu_custom_call.1} parent=1 // pred_region
      %232 = dma.done [#allocation4], 128
    $region41: #{tpu_custom_call.1} parent=1 // pred_fallthru
      _
    %233 = vsyncpa [#allocation3], 1
    %234 = vsyncpa [#allocation6], 1
    %235 = vsyncpa [#allocation9], 1
    %236 = vsyncpa [#allocation4], 1

</llo_original>
